<compile_context>
chip_gen: v5e
topology: v5e:2x2
jax: 0.10.0
libtpu: 0.0.40
codegen_flags: <defaults>
</compile_context>

<pallas_src>
import functools

import jax
import jax.numpy as jnp
import numpy as np
from jax.experimental import pallas as pl
from jax.experimental.pallas import tpu as pltpu


# ----------------------------- Pallas kernel ------------------------------ #
def _critic_kernel(*refs, use_bn):
    eps = 1e-5
    if use_bn:
        (s_ref, a_ref,
         w1_ref, g1_ref, bt1_ref,
         w2_ref, g2_ref, bt2_ref,
         w3_ref, b3_ref, q_ref) = refs
    else:
        (s_ref, a_ref,
         w1_ref, b1_ref,
         w2_ref, b2_ref,
         w3_ref, b3_ref, q_ref) = refs

    inv_n = 1.0 / s_ref.shape[0]

    def bn(y, g_ref, bt_ref):
        # Training-mode BatchNorm1d (biased variance) folded into one affine.
        s1 = jnp.sum(y, axis=0, keepdims=True)
        s2 = jnp.sum(y * y, axis=0, keepdims=True)
        mean = s1 * inv_n
        var = s2 * inv_n - mean * mean
        scale = g_ref[...] * jax.lax.rsqrt(var + eps)      # EUP rsqrt
        shift = bt_ref[...] - mean * scale
        return y * scale + shift                           # 2 VPU ops / elem

    # fc1 on cat([state, action], 1): single in-kernel concat + one MXU matmul.
    sa = jnp.concatenate([s_ref[...], a_ref[...]], axis=-1).astype(jnp.bfloat16)
    y1 = jnp.dot(sa, w1_ref[...], preferred_element_type=jnp.float32)
    if use_bn:
        y1 = bn(y1, g1_ref, bt1_ref)          # b1 dropped: BN cancels it
    else:
        y1 = y1 + b1_ref[...]
    h1 = jnp.maximum(y1, 0.0)

    y2 = jnp.dot(h1.astype(jnp.bfloat16), w2_ref[...],
                 preferred_element_type=jnp.float32)
    if use_bn:
        y2 = bn(y2, g2_ref, bt2_ref)          # b2 dropped: BN cancels it
    else:
        y2 = y2 + b2_ref[...]
    h2 = jnp.maximum(y2, 0.0)

    # fc3: (B, 300) x (300, 1).  N == 1, so broadcast-multiply + lane-sum with
    # w3 stored as a (1, 300) f32 row (VPU + XLU, no degenerate MXU matmul).
    q_ref[...] = (jnp.sum(h2 * w3_ref[...], axis=-1, keepdims=True)
                  + b3_ref[...])


# ------------------------ one-time param preparation ----------------------- #
def prepare_params(raw):
    """One-time layout/dtype preparation.

    Call at parameter init / after each optimizer step, NOT per forward.
    `raw` holds float32 arrays with Linear weights stored as (in, out), i.e.
    the forward computes y = x @ W + b (== torch's x @ W.T + b).
    """
    f32, bf16 = jnp.float32, jnp.bfloat16
    return {
        "w1":  raw["w1"].astype(bf16),                 # (S+A, 400) bf16
        "b1":  raw["b1"].astype(f32).reshape(1, -1),
        "g1":  raw["g1"].astype(f32).reshape(1, -1),
        "bt1": raw["bt1"].astype(f32).reshape(1, -1),
        "w2":  raw["w2"].astype(bf16),                 # (400, 300) bf16
        "b2":  raw["b2"].astype(f32).reshape(1, -1),
        "g2":  raw["g2"].astype(f32).reshape(1, -1),
        "bt2": raw["bt2"].astype(f32).reshape(1, -1),
        "w3":  raw["w3"].astype(f32).reshape(1, -1),   # (1, 300) f32 row
        "b3":  raw["b3"].astype(f32).reshape(1, 1),
    }


# ------------------------------ JAX wrapper -------------------------------- #
def critic_forward(state, action, params):
    """Critic Q(s, a) as a single pallas_call. `params` from prepare_params()."""
    B = state.shape[0]
    use_bn = B > 1   # mirrors `if state_action.size(0) > 1` in the PyTorch code

    if use_bn:
        # b1/b2 omitted: Linear bias followed by training-mode BN is redundant.
        args = (state, action,
                params["w1"], params["g1"], params["bt1"],
                params["w2"], params["g2"], params["bt2"],
                params["w3"], params["b3"])
    else:
        args = (state, action,
                params["w1"], params["b1"],
                params["w2"], params["b2"],
                params["w3"], params["b3"])

    # Whole-array blocks in VMEM, no grid, no pipelining: the entire problem
    # (~0.26 MiB of weights) is resident for a single kernel invocation.
    vmem = pl.BlockSpec(memory_space=pltpu.MemorySpace.VMEM)
    return pl.pallas_call(
        functools.partial(_critic_kernel, use_bn=use_bn),
        out_shape=jax.ShapeDtypeStruct((B, 1), jnp.float32),
        in_specs=[vmem] * len(args),
        out_specs=vmem,
    )(*args)


# --------------------------- pure-JAX reference ---------------------------- #
def critic_reference(state, action, params):
    """PyTorch-faithful math (cat -> fc+bias -> two-pass BN -> relu -> ...),
    with bf16 matmul inputs / f32 accumulation to match the kernel's precision.
    Verifies the kernel's algebraic simplifications (bias cancellation,
    one-pass variance) numerically."""
    eps = 1e-5

    def bn(y, g, bt):
        m = jnp.mean(y, axis=0, keepdims=True)
        v = jnp.mean((y - m) ** 2, axis=0, keepdims=True)
        return (y - m) / jnp.sqrt(v + eps) * g + bt

    use_bn = state.shape[0] > 1
    sa = jnp.concatenate([state, action], axis=1).astype(jnp.bfloat16)
    y1 = (jnp.dot(sa, params["w1"], preferred_element_type=jnp.float32)
          + params["b1"])
    if use_bn:
        y1 = bn(y1, params["g1"], params["bt1"])
    h1 = jnp.maximum(y1, 0.0)
    y2 = (jnp.dot(h1.astype(jnp.bfloat16), params["w2"],
                  preferred_element_type=jnp.float32) + params["b2"])
    if use_bn:
        y2 = bn(y2, params["g2"], params["bt2"])
    h2 = jnp.maximum(y2, 0.0)
    return jnp.sum(h2 * params["w3"], axis=-1, keepdims=True) + params["b3"]


# ---------------------------------- main ----------------------------------- #
if __name__ == "__main__":
    state_dim, action_dim = 16, 4
    batch = 8   # > 1 -> BatchNorm path

    key = jax.random.PRNGKey(0)
    ks = jax.random.split(key, 8)

    def uinit(k, shape, fan_in):
        bound = 1.0 / np.sqrt(fan_in)
        return jax.random.uniform(k, shape, jnp.float32, -bound, bound)

    in1 = state_dim + action_dim
    raw = {
        # Linear weights stored as (in, out); PyTorch-style uniform init.
        "w1": uinit(ks[0], (in1, 400), in1),
        "b1": uinit(ks[1], (400,), in1),
        "w2": uinit(ks[2], (400, 300), 400),
        "b2": uinit(ks[3], (300,), 400),
        "w3": uinit(ks[4], (300, 1), 300),
        "b3": uinit(ks[5], (1,), 300),
        # BatchNorm affine params at default init (gamma=1, beta=0).
        "g1": jnp.ones((400,), jnp.float32), "bt1": jnp.zeros((400,), jnp.float32),
        "g2": jnp.ones((300,), jnp.float32), "bt2": jnp.zeros((300,), jnp.float32),
    }
    params = prepare_params(raw)   # one-time; not per forward call

    state = jax.random.normal(ks[6], (batch, state_dim), jnp.float32)
    action = jax.random.normal(ks[7], (batch, action_dim), jnp.float32)

    # BatchNorm path (batch > 1).
    q = jax.block_until_ready(critic_forward(state, action, params))
    ref = critic_reference(state, action, params)
    assert q.shape == (batch, 1)
    assert np.allclose(np.asarray(q), np.asarray(ref), atol=2e-3, rtol=2e-3), \
        "mismatch vs reference (BN path)"

    # No-BN path (batch == 1); the PyTorch else-branch is buggy (undefined q),
    # implemented here as the evident intent: plain fc+relu stack, biases kept.
    q1 = jax.block_until_ready(critic_forward(state[:1], action[:1], params))
    ref1 = critic_reference(state[:1], action[:1], params)
    assert q1.shape == (1, 1)
    assert np.allclose(np.asarray(q1), np.asarray(ref1), atol=2e-3, rtol=2e-3), \
        "mismatch vs reference (no-BN path)"

    print("KERNEL_OK")
</pallas_src>

<mosaic_0001>
module attributes {stable_mosaic.version = 11 : i64} {
  func.func @_critic_kernel(%arg0: memref<8x16xf32, #tpu.memory_space<vmem>>, %arg1: memref<8x4xf32, #tpu.memory_space<vmem>>, %arg2: memref<20x400xbf16, #tpu.memory_space<vmem>>, %arg3: memref<1x400xf32, #tpu.memory_space<vmem>>, %arg4: memref<1x400xf32, #tpu.memory_space<vmem>>, %arg5: memref<400x300xbf16, #tpu.memory_space<vmem>>, %arg6: memref<1x300xf32, #tpu.memory_space<vmem>>, %arg7: memref<1x300xf32, #tpu.memory_space<vmem>>, %arg8: memref<1x300xf32, #tpu.memory_space<vmem>>, %arg9: memref<1x1xf32, #tpu.memory_space<vmem>>, %arg10: memref<8x1xf32, #tpu.memory_space<vmem>>) attributes {dimension_semantics = [], scalar_prefetch = 0 : i64, scratch_operands = 0 : i64, tpu.core_type = #tpu.core_type<tc>} {
    %c0 = arith.constant 0 : index
    %c0_0 = arith.constant 0 : index
    %0 = vector.load %arg0[%c0, %c0_0] : memref<8x16xf32, #tpu.memory_space<vmem>>, vector<8x16xf32>
    %c0_1 = arith.constant 0 : index
    %c0_2 = arith.constant 0 : index
    %1 = vector.load %arg1[%c0_1, %c0_2] : memref<8x4xf32, #tpu.memory_space<vmem>>, vector<8x4xf32>
    %2 = tpu.concatenate %0, %1 in 1 : vector<8x16xf32>, vector<8x4xf32> -> vector<8x20xf32>
    %3 = arith.truncf %2 : vector<8x20xf32> to vector<8x20xbf16>
    %c0_3 = arith.constant 0 : index
    %c0_4 = arith.constant 0 : index
    %4 = vector.load %arg2[%c0_3, %c0_4] : memref<20x400xbf16, #tpu.memory_space<vmem>>, vector<20x400xbf16>
    %cst = arith.constant dense<0.000000e+00> : vector<8x400xf32>
    %5 = tpu.matmul %3, %4, %cst {dimension_numbers = #tpu.dot_dimension_numbers<[1], [0], [0], [1], [0, 0, 1, 1], [], []>} : vector<8x20xbf16>, vector<20x400xbf16>, vector<8x400xf32> -> vector<8x400xf32>
    %cst_5 = arith.constant dense<0.000000e+00> : vector<400xf32>
    %6 = vector.multi_reduction <add>, %5, %cst_5 [0] : vector<8x400xf32> to vector<400xf32>
    %7 = vector.shape_cast %6 : vector<400xf32> to vector<1x400xf32>
    %8 = arith.mulf %5, %5 : vector<8x400xf32>
    %cst_6 = arith.constant dense<0.000000e+00> : vector<400xf32>
    %9 = vector.multi_reduction <add>, %8, %cst_6 [0] : vector<8x400xf32> to vector<400xf32>
    %10 = vector.shape_cast %9 : vector<400xf32> to vector<1x400xf32>
    %cst_7 = arith.constant 1.250000e-01 : f32
    %11 = vector.broadcast %cst_7 : f32 to vector<1x400xf32>
    %12 = arith.mulf %7, %11 : vector<1x400xf32>
    %cst_8 = arith.constant 1.250000e-01 : f32
    %13 = vector.broadcast %cst_8 : f32 to vector<1x400xf32>
    %14 = arith.mulf %10, %13 : vector<1x400xf32>
    %15 = arith.mulf %12, %12 : vector<1x400xf32>
    %16 = arith.subf %14, %15 : vector<1x400xf32>
    %c0_9 = arith.constant 0 : index
    %c0_10 = arith.constant 0 : index
    %17 = vector.load %arg3[%c0_9, %c0_10] : memref<1x400xf32, #tpu.memory_space<vmem>>, vector<1x400xf32>
    %cst_11 = arith.constant 9.99999974E-6 : f32
    %18 = vector.broadcast %cst_11 : f32 to vector<1x400xf32>
    %19 = arith.addf %16, %18 : vector<1x400xf32>
    %20 = math.rsqrt %19 : vector<1x400xf32>
    %21 = arith.mulf %17, %20 : vector<1x400xf32>
    %c0_12 = arith.constant 0 : index
    %c0_13 = arith.constant 0 : index
    %22 = vector.load %arg4[%c0_12, %c0_13] : memref<1x400xf32, #tpu.memory_space<vmem>>, vector<1x400xf32>
    %23 = arith.mulf %12, %21 : vector<1x400xf32>
    %24 = arith.subf %22, %23 : vector<1x400xf32>
    %25 = vector.broadcast %21 : vector<1x400xf32> to vector<8x400xf32>
    %26 = arith.mulf %5, %25 : vector<8x400xf32>
    %27 = vector.broadcast %24 : vector<1x400xf32> to vector<8x400xf32>
    %28 = arith.addf %26, %27 : vector<8x400xf32>
    %cst_14 = arith.constant 0.000000e+00 : f32
    %29 = vector.broadcast %cst_14 : f32 to vector<8x400xf32>
    %30 = arith.maximumf %28, %29 : vector<8x400xf32>
    %31 = arith.truncf %30 : vector<8x400xf32> to vector<8x400xbf16>
    %c0_15 = arith.constant 0 : index
    %c0_16 = arith.constant 0 : index
    %32 = vector.load %arg5[%c0_15, %c0_16] : memref<400x300xbf16, #tpu.memory_space<vmem>>, vector<400x300xbf16>
    %cst_17 = arith.constant dense<0.000000e+00> : vector<8x300xf32>
    %33 = tpu.matmul %31, %32, %cst_17 {dimension_numbers = #tpu.dot_dimension_numbers<[1], [0], [0], [1], [0, 0, 1, 1], [], []>} : vector<8x400xbf16>, vector<400x300xbf16>, vector<8x300xf32> -> vector<8x300xf32>
    %cst_18 = arith.constant dense<0.000000e+00> : vector<300xf32>
    %34 = vector.multi_reduction <add>, %33, %cst_18 [0] : vector<8x300xf32> to vector<300xf32>
    %35 = vector.shape_cast %34 : vector<300xf32> to vector<1x300xf32>
    %36 = arith.mulf %33, %33 : vector<8x300xf32>
    %cst_19 = arith.constant dense<0.000000e+00> : vector<300xf32>
    %37 = vector.multi_reduction <add>, %36, %cst_19 [0] : vector<8x300xf32> to vector<300xf32>
    %38 = vector.shape_cast %37 : vector<300xf32> to vector<1x300xf32>
    %cst_20 = arith.constant 1.250000e-01 : f32
    %39 = vector.broadcast %cst_20 : f32 to vector<1x300xf32>
    %40 = arith.mulf %35, %39 : vector<1x300xf32>
    %cst_21 = arith.constant 1.250000e-01 : f32
    %41 = vector.broadcast %cst_21 : f32 to vector<1x300xf32>
    %42 = arith.mulf %38, %41 : vector<1x300xf32>
    %43 = arith.mulf %40, %40 : vector<1x300xf32>
    %44 = arith.subf %42, %43 : vector<1x300xf32>
    %c0_22 = arith.constant 0 : index
    %c0_23 = arith.constant 0 : index
    %45 = vector.load %arg6[%c0_22, %c0_23] : memref<1x300xf32, #tpu.memory_space<vmem>>, vector<1x300xf32>
    %cst_24 = arith.constant 9.99999974E-6 : f32
    %46 = vector.broadcast %cst_24 : f32 to vector<1x300xf32>
    %47 = arith.addf %44, %46 : vector<1x300xf32>
    %48 = math.rsqrt %47 : vector<1x300xf32>
    %49 = arith.mulf %45, %48 : vector<1x300xf32>
    %c0_25 = arith.constant 0 : index
    %c0_26 = arith.constant 0 : index
    %50 = vector.load %arg7[%c0_25, %c0_26] : memref<1x300xf32, #tpu.memory_space<vmem>>, vector<1x300xf32>
    %51 = arith.mulf %40, %49 : vector<1x300xf32>
    %52 = arith.subf %50, %51 : vector<1x300xf32>
    %53 = vector.broadcast %49 : vector<1x300xf32> to vector<8x300xf32>
    %54 = arith.mulf %33, %53 : vector<8x300xf32>
    %55 = vector.broadcast %52 : vector<1x300xf32> to vector<8x300xf32>
    %56 = arith.addf %54, %55 : vector<8x300xf32>
    %cst_27 = arith.constant 0.000000e+00 : f32
    %57 = vector.broadcast %cst_27 : f32 to vector<8x300xf32>
    %58 = arith.maximumf %56, %57 : vector<8x300xf32>
    %c0_28 = arith.constant 0 : index
    %c0_29 = arith.constant 0 : index
    %59 = vector.load %arg8[%c0_28, %c0_29] : memref<1x300xf32, #tpu.memory_space<vmem>>, vector<1x300xf32>
    %60 = vector.broadcast %59 : vector<1x300xf32> to vector<8x300xf32>
    %61 = arith.mulf %58, %60 : vector<8x300xf32>
    %cst_30 = arith.constant dense<0.000000e+00> : vector<8xf32>
    %62 = vector.multi_reduction <add>, %61, %cst_30 [1] : vector<8x300xf32> to vector<8xf32>
    %63 = vector.shape_cast %62 : vector<8xf32> to vector<8x1xf32>
    %c0_31 = arith.constant 0 : index
    %c0_32 = arith.constant 0 : index
    %64 = vector.load %arg9[%c0_31, %c0_32] : memref<1x1xf32, #tpu.memory_space<vmem>>, vector<1x1xf32>
    %65 = vector.broadcast %64 : vector<1x1xf32> to vector<8x1xf32>
    %66 = arith.addf %63, %65 : vector<8x1xf32>
    %c0_33 = arith.constant 0 : index
    %c0_34 = arith.constant 0 : index
    %67 = vector.load %arg10[%c0_33, %c0_34] : memref<8x1xf32, #tpu.memory_space<vmem>>, vector<8x1xf32>
    tpu.vector_store %arg10[%c0_33, %c0_34], %66 {strides = array<i32>} : memref<8x1xf32, #tpu.memory_space<vmem>>, vector<8x1xf32>,
    return
  }
}

</mosaic_0001>

<llo_original>
// kernel: tpu_custom_call.1
$region0: #{tpu_custom_call.1}
  #allocation0 [shape = 'u32[]', space=smem, size = 0x4, offset = 0x4, fixed_abs, tag = 'smem constant byte address 0x4 - core index']
  #allocation1 [shape = 'u32[72,128]{1,0:T(1,128)}', space=vmem, size = 0x9000, scoped, tag = 'internal scratch']
  #allocation2 [shape = 'f32[1,1]{1,0:T(1,128)S(1)}', space=vmem, size = 0x200, scoped, tag = 'scoped memory for tpu_custom_call.1']
  %s0 = inlined_call_operand.vmem [shape: f32[8,16], index: 0, kind: input, shape index: {}]
  %s1 = inlined_call_operand.vmem [shape: f32[8,4], index: 1, kind: input, shape index: {}]
  %s2 = inlined_call_operand.hbm [shape: bf16[20,400], index: 2, kind: input, shape index: {}]
  %s3 = inlined_call_operand.vmem [shape: f32[1,400], index: 3, kind: input, shape index: {}]
  %s4 = inlined_call_operand.vmem [shape: f32[1,400], index: 4, kind: input, shape index: {}]
  %s5 = inlined_call_operand.hbm [shape: bf16[400,300], index: 5, kind: input, shape index: {}]
  %s6 = inlined_call_operand.vmem [shape: f32[1,300], index: 6, kind: input, shape index: {}]
  %s7 = inlined_call_operand.hbm [shape: f32[1,300], index: 7, kind: input, shape index: {}]
  %s8 = inlined_call_operand.hbm [shape: f32[1,300], index: 8, kind: input, shape index: {}]
  %s9 = inlined_call_operand.<no memory space> [shape: f32[1,1], index: 9, kind: input, shape index: {}]
  %s10 = inlined_call_operand.vmem [shape: f32[8,1], index: 10, kind: output, shape index: {}]
  %s11 = sld [smem:[#allocation0]]
  $region66: #{tpu_custom_call.1} parent=0
    _
  %s13 = ssub.s32 1, %s11
  %s14 = scalar_select 0, %s13, %s11
  %v15 = vstv %s9
  %16 = vst [vmem:[#allocation2] sm:$0x1] %v15
  $region1: #{tpu_custom_call.1} parent=0
    #allocation3 [shape = 'u8[24576]{0}', space=vmem, size = 0x6000, scoped, tag = 'input window, operand 2, single buffered']
    #allocation4 [shape = 's32[1]{0}', space=sflag, size = 0x4, scoped, tag = 'scoped memory for tpu_custom_call.1']
    #allocation5 [shape = 'u8[307200]{0}', space=vmem, size = 0x4b000, scoped, tag = 'input window, operand 5, single buffered']
    #allocation6 [shape = 's32[1]{0}', space=sflag, size = 0x4, scoped, tag = 'scoped memory for tpu_custom_call.1']
    #allocation7 [shape = 'u8[1536]{0}', space=vmem, size = 0x800, scoped, tag = 'input window, operand 7, single buffered']
    #allocation8 [shape = 'u8[1536]{0}', space=vmem, size = 0x800, scoped, tag = 'input window, operand 8, single buffered']
    #allocation9 [shape = 's32[1]{0}', space=sflag, size = 0x4, scoped, tag = 'scoped memory for tpu_custom_call.1']
    %17 = vsyncpa [#allocation4], 0
    %18 = vsyncpa [#allocation6], 0
    %19 = vsyncpa [#allocation9], 0
    // Predicated region
    $region2: #{tpu_custom_call.1} parent=1 // pred_check
      _
    $region3: #{tpu_custom_call.1} parent=1 // pred_check_branch
      %21 = sbr.rel (0) target = $region5
    $region4: #{tpu_custom_call.1} parent=1 // pred_region
      _
    $region5: #{tpu_custom_call.1} parent=1 // pred_fallthru
      _
    // Predicated region
    $region6: #{tpu_custom_call.1} parent=1 // pred_check
      _
    $region7: #{tpu_custom_call.1} parent=1 // pred_check_branch
      %23 = sbr.rel (0) target = $region9
    $region8: #{tpu_custom_call.1} parent=1 // pred_region
      _
    $region9: #{tpu_custom_call.1} parent=1 // pred_fallthru
      _
    // Predicated region
    $region10: #{tpu_custom_call.1} parent=1 // pred_check
      _
    $region11: #{tpu_custom_call.1} parent=1 // pred_check_branch
      %25 = sbr.rel (0) target = $region13
    $region12: #{tpu_custom_call.1} parent=1 // pred_region
      %27 = vsyncadd [#allocation4], 0
      %s28 = sshll.u32 %s2, 4
      %s29 = int_to_ptr.hbm [resolvable:$true] %s28
      %s30 = sshll.u32 [#allocation3], 4
      %s31 = int_to_ptr.vmem [resolvable:$true] %s30
      %36 = dma.hbm_to_vmem [thread:$0]  %s29, 768, %s31, [#allocation4], 256, 256, 16
    $region13: #{tpu_custom_call.1} parent=1 // pred_fallthru
      _
    // Predicated region
    $region14: #{tpu_custom_call.1} parent=1 // pred_check
      _
    $region15: #{tpu_custom_call.1} parent=1 // pred_check_branch
      %38 = sbr.rel (0) target = $region17
    $region16: #{tpu_custom_call.1} parent=1 // pred_region
      _
    $region17: #{tpu_custom_call.1} parent=1 // pred_fallthru
      _
    // Predicated region
    $region18: #{tpu_custom_call.1} parent=1 // pred_check
      _
    $region19: #{tpu_custom_call.1} parent=1 // pred_check_branch
      %40 = sbr.rel (0) target = $region21
    $region20: #{tpu_custom_call.1} parent=1 // pred_region
      _
    $region21: #{tpu_custom_call.1} parent=1 // pred_fallthru
      _
    // Predicated region
    $region22: #{tpu_custom_call.1} parent=1 // pred_check
      _
    $region23: #{tpu_custom_call.1} parent=1 // pred_check_branch
      %42 = sbr.rel (0) target = $region25
    $region24: #{tpu_custom_call.1} parent=1 // pred_region
      %44 = vsyncadd [#allocation6], 0
      %s45 = sshll.u32 %s5, 4
      %s46 = int_to_ptr.hbm [resolvable:$true] %s45
      %s47 = sshll.u32 [#allocation5], 4
      %s48 = int_to_ptr.vmem [resolvable:$true] %s47
      %53 = dma.hbm_to_vmem [thread:$0]  %s46, 9600, %s48, [#allocation6], 192, 192, 12
    $region25: #{tpu_custom_call.1} parent=1 // pred_fallthru
      _
    // Predicated region
    $region26: #{tpu_custom_call.1} parent=1 // pred_check
      _
    $region27: #{tpu_custom_call.1} parent=1 // pred_check_branch
      %55 = sbr.rel (0) target = $region29
    $region28: #{tpu_custom_call.1} parent=1 // pred_region
      _
    $region29: #{tpu_custom_call.1} parent=1 // pred_fallthru
      _
    // Predicated region
    $region30: #{tpu_custom_call.1} parent=1 // pred_check
      _
    $region31: #{tpu_custom_call.1} parent=1 // pred_check_branch
      %57 = sbr.rel (0) target = $region33
    $region32: #{tpu_custom_call.1} parent=1 // pred_region
      %59 = vsyncadd [#allocation6], 0
      %s61 = sshll.u32 %s7, 4
      %s62 = int_to_ptr.hbm [resolvable:$true] %s61
      %s63 = sshll.u32 [#allocation7], 4
      %s64 = int_to_ptr.vmem [resolvable:$true] %s63
      %66 = dma.hbm_to_vmem [thread:$0]  %s62, 48, %s64, [#allocation6]
    $region33: #{tpu_custom_call.1} parent=1 // pred_fallthru
      _
    // Predicated region
    $region34: #{tpu_custom_call.1} parent=1 // pred_check
      _
    $region35: #{tpu_custom_call.1} parent=1 // pred_check_branch
      %68 = sbr.rel (0) target = $region37
    $region36: #{tpu_custom_call.1} parent=1 // pred_region
      %70 = vsyncadd [#allocation9], 0
      %s72 = sshll.u32 %s8, 4
      %s73 = int_to_ptr.hbm [resolvable:$true] %s72
      %s74 = sshll.u32 [#allocation8], 4
      %s75 = int_to_ptr.vmem [resolvable:$true] %s74
      %77 = dma.hbm_to_vmem [thread:$0]  %s73, 48, %s75, [#allocation9]
    $region37: #{tpu_custom_call.1} parent=1 // pred_fallthru
      _
    // Predicated region
    $region38: #{tpu_custom_call.1} parent=1 // pred_check
      _
    $region39: #{tpu_custom_call.1} parent=1 // pred_check_branch
      %79 = sbr.rel (0) target = $region41
    $region40: #{tpu_custom_call.1} parent=1 // pred_region
      _
    $region41: #{tpu_custom_call.1} parent=1 // pred_fallthru
      _
    // Predicated region
    $region42: #{tpu_custom_call.1} parent=1 // pred_check
      _
    $region43: #{tpu_custom_call.1} parent=1 // pred_check_branch
      %81 = sbr.rel (0) target = $region45
    $region44: #{tpu_custom_call.1} parent=1 // pred_region
      %83 = dma.done [#allocation4], 768
    $region45: #{tpu_custom_call.1} parent=1 // pred_fallthru
      _
    // Predicated region
    $region46: #{tpu_custom_call.1} parent=1 // pred_check
      _
    $region47: #{tpu_custom_call.1} parent=1 // pred_check_branch
      %85 = sbr.rel (0) target = $region49
    $region48: #{tpu_custom_call.1} parent=1 // pred_region
      %87 = dma.done [#allocation6], 9600
    $region49: #{tpu_custom_call.1} parent=1 // pred_fallthru
      _
    // Predicated region
    $region50: #{tpu_custom_call.1} parent=1 // pred_check
      _
    $region51: #{tpu_custom_call.1} parent=1 // pred_check_branch
      %89 = sbr.rel (0) target = $region53
    $region52: #{tpu_custom_call.1} parent=1 // pred_region
      %91 = dma.done [#allocation6], 48
    $region53: #{tpu_custom_call.1} parent=1 // pred_fallthru
      _
    // Predicated region
    $region54: #{tpu_custom_call.1} parent=1 // pred_check
      _
    $region55: #{tpu_custom_call.1} parent=1 // pred_check_branch
      %93 = sbr.rel (0) target = $region57
    $region56: #{tpu_custom_call.1} parent=1 // pred_region
      %95 = dma.done [#allocation9], 48
    $region57: #{tpu_custom_call.1} parent=1 // pred_fallthru
      _
    %v97 = vld [vmem:[%s0] sm:$0xff]
    %v98 = vld [vmem:[%s1] sm:$0xff]
    %100 = vrot.lane.b32.xlu0 %v98, 16
    %v101 = vpop.permute.xlu0 %100
    %vm103 = vcmask 130048
    %v104 = vsel %vm103, %v97, %v101
    %v105 = vpack.c.bf16 %v104, %v104
    %v106 = vld [vmem:[#allocation3] sm:$0xff]
    %v107 = vld [vmem:[#allocation3 + $0x8] sm:$0xff]
    %v108 = vld [vmem:[#allocation3 + $0x10] sm:$0xff]
    %v109 = vld [vmem:[#allocation3 + $0x18] sm:$0xff]
    %v110 = vld [vmem:[#allocation3 + $0x20] sm:$0x33]
    %v111 = vld [vmem:[#allocation3 + $0x28] sm:$0x33]
    %v118 = vunpack.c.l.b16 %v106
    %v119 = vunpack.c.h.b16 %v106
    %v120 = vunpack.c.l.b16 %v107
    %v121 = vunpack.c.h.b16 %v107
    %v122 = vunpack.c.l.b16 %v108
    %v123 = vunpack.c.h.b16 %v108
    %v124 = vunpack.c.l.b16 %v109
    %v125 = vunpack.c.h.b16 %v109
    %v126 = vunpack.c.l.b16 %v110
    %v127 = vunpack.c.h.b16 %v110
    %v128 = vunpack.c.l.b16 %v111
    %v129 = vunpack.c.h.b16 %v111
    %v130 = vpack.c.b16 %v122, %v118
    %v131 = vpack.c.b16 %v123, %v119
    %v132 = vpack.c.b16 %v124, %v120
    %v133 = vpack.c.b16 %v125, %v121
    %v134 = vpack.c.b16 %v126, %v126
    %v135 = vpack.c.b16 %v127, %v127
    %v136 = vpack.c.b16 %v128, %v128
    %v137 = vpack.c.b16 %v129, %v129
    %vm142 = vcmask 162816
    %v144 = vsel %vm142, %v105, 0
    %vm146 = vcmask 1041408
    %v148 = vsel %vm146, %v134, 0
    %v151 = vsel %vm146, %v135, 0
    %v154 = vsel %vm146, %v136, 0
    %v157 = vsel %vm146, %v137, 0
    %159 = vmatpush.bf16.msra.mxu0 0
    %160 = vmatpush.bf16.msra.mxu0 0
    %161 = vmatpush.bf16.msra.mxu0 0
    %162 = vmatpush.bf16.msra.mxu0 0
    %163 = vmatpush.bf16.msra.mxu0 0
    %164 = vmatpush.bf16.msra.mxu0 0
    %165 = vmatpush.bf16.msra.mxu0 %v148
    %166 = vmatpush.bf16.msra.mxu0 %v130
    %167 = vmatmul.bf16.gmra.mxu0 %v144
    %v168 = vpop.f32.mrf.mxu0
    %v169 = vadd.f32 0.0, %v168
    %v170 = vpop.f32.mrf.mxu0
    %171 = vdwg.mxu0
    %172 = vmatpush.bf16.msra.mxu0 0
    %173 = vmatpush.bf16.msra.mxu0 0
    %174 = vmatpush.bf16.msra.mxu0 0
    %175 = vmatpush.bf16.msra.mxu0 0
    %176 = vmatpush.bf16.msra.mxu0 0
    %177 = vmatpush.bf16.msra.mxu0 0
    %178 = vmatpush.bf16.msra.mxu0 %v151
    %179 = vmatpush.bf16.msra.mxu0 %v131
    %180 = vmatmul.bf16.gmra.mxu0 %v144
    %v181 = vpop.f32.mrf.mxu0
    %v182 = vadd.f32 0.0, %v181
    %v183 = vpop.f32.mrf.mxu0
    %184 = vdwg.mxu0
    %185 = vmatpush.bf16.msra.mxu0 0
    %186 = vmatpush.bf16.msra.mxu0 0
    %187 = vmatpush.bf16.msra.mxu0 0
    %188 = vmatpush.bf16.msra.mxu0 0
    %189 = vmatpush.bf16.msra.mxu0 0
    %190 = vmatpush.bf16.msra.mxu0 0
    %191 = vmatpush.bf16.msra.mxu0 %v154
    %192 = vmatpush.bf16.msra.mxu0 %v132
    %193 = vmatmul.bf16.gmra.mxu0 %v144
    %v194 = vpop.f32.mrf.mxu0
    %v195 = vadd.f32 0.0, %v194
    %v196 = vpop.f32.mrf.mxu0
    %197 = vdwg.mxu0
    %198 = vmatpush.bf16.msra.mxu0 0
    %199 = vmatpush.bf16.msra.mxu0 0
    %200 = vmatpush.bf16.msra.mxu0 0
    %201 = vmatpush.bf16.msra.mxu0 0
    %202 = vmatpush.bf16.msra.mxu0 0
    %203 = vmatpush.bf16.msra.mxu0 0
    %204 = vmatpush.bf16.msra.mxu0 %v157
    %205 = vmatpush.bf16.msra.mxu0 %v133
    %206 = vmatmul.bf16.gmra.mxu0 %v144
    %v207 = vpop.f32.mrf.mxu0
    %v208 = vadd.f32 0.0, %v207
    %v209 = vpop.f32.mrf.mxu0
    %210 = vdwg.mxu0
    %v211 = vrot.slane %v169, 4
    %v212 = vadd.f32 %v169, %v211
    %v213 = vrot.slane %v212, 2
    %v214 = vadd.f32 %v212, %v213
    %v215 = vrot.slane %v214, 1
    %v216 = vadd.f32 %v214, %v215
    %v217 = vrot.slane %v182, 4
    %v218 = vadd.f32 %v182, %v217
    %v219 = vrot.slane %v218, 2
    %v220 = vadd.f32 %v218, %v219
    %v221 = vrot.slane %v220, 1
    %v222 = vadd.f32 %v220, %v221
    %v223 = vrot.slane %v195, 4
    %v224 = vadd.f32 %v195, %v223
    %v225 = vrot.slane %v224, 2
    %v226 = vadd.f32 %v224, %v225
    %v227 = vrot.slane %v226, 1
    %v228 = vadd.f32 %v226, %v227
    %v229 = vsel %vm103, %v208, 0.0
    %v230 = vrot.slane %v229, 4
    %v231 = vadd.f32 %v229, %v230
    %v232 = vrot.slane %v231, 2
    %v233 = vadd.f32 %v231, %v232
    %v234 = vrot.slane %v233, 1
    %v235 = vadd.f32 %v233, %v234
    %v236 = vmul.f32 %v169, %v169
    %v237 = vmul.f32 %v182, %v182
    %v238 = vmul.f32 %v195, %v195
    %v239 = vmul.f32 %v208, %v208
    %v240 = vrot.slane %v236, 4
    %v241 = vadd.f32 %v236, %v240
    %v242 = vrot.slane %v241, 2
    %v243 = vadd.f32 %v241, %v242
    %v244 = vrot.slane %v243, 1
    %v245 = vadd.f32 %v243, %v244
    %v246 = vrot.slane %v237, 4
    %v247 = vadd.f32 %v237, %v246
    %v248 = vrot.slane %v247, 2
    %v249 = vadd.f32 %v247, %v248
    %v250 = vrot.slane %v249, 1
    %v251 = vadd.f32 %v249, %v250
    %v252 = vrot.slane %v238, 4
    %v253 = vadd.f32 %v238, %v252
    %v254 = vrot.slane %v253, 2
    %v255 = vadd.f32 %v253, %v254
    %v256 = vrot.slane %v255, 1
    %v257 = vadd.f32 %v255, %v256
    %v258 = vsel %vm103, %v239, 0.0
    %v259 = vrot.slane %v258, 4
    %v260 = vadd.f32 %v258, %v259
    %v261 = vrot.slane %v260, 2
    %v262 = vadd.f32 %v260, %v261
    %v263 = vrot.slane %v262, 1
    %v264 = vadd.f32 %v262, %v263
    %v265 = vmul.f32 %v216, 0.125
    %v266 = vmul.f32 %v222, 0.125
    %v267 = vmul.f32 %v228, 0.125
    %v268 = vmul.f32 %v235, 0.125
    %v269 = vmul.f32 %v245, 0.125
    %v270 = vmul.f32 %v251, 0.125
    %v271 = vmul.f32 %v257, 0.125
    %v272 = vmul.f32 %v264, 0.125
    %v273 = vmul.f32 %v265, %v265
    %v274 = vmul.f32 %v266, %v266
    %v275 = vmul.f32 %v267, %v267
    %v276 = vmul.f32 %v268, %v268
    %v277 = vsub.f32 %v269, %v273
    %v278 = vsub.f32 %v270, %v274
    %v279 = vsub.f32 %v271, %v275
    %v280 = vsub.f32 %v272, %v276
    %v281 = vld [vmem:[%s3] sm:$0xf]
    %v282 = vadd.f32 %v277, 1e-05
    %v283 = vadd.f32 %v278, 1e-05
    %v284 = vadd.f32 %v279, 1e-05
    %v285 = vadd.f32 %v280, 1e-05
    %v286 = vrsqrt.pop %v282
    %v287 = vmul.f32 %v286, %v282
    %v288 = vmul.f32 %v287, %v286
    %v289 = vmul.f32 0.5, %v288
    %v290 = vsub.f32 1.5, %v289
    %v291 = vmul.f32 %v286, %v290
    %vm292 = vweird.f32 %v282
    %vm293 = vweird.f32 %v286
    %vm294 = vmor %vm292, %vm293
    %v295 = vsel %vm294, %v286, %v291
    %v296 = vrsqrt.pop %v283
    %v297 = vmul.f32 %v296, %v283
    %v298 = vmul.f32 %v297, %v296
    %v299 = vmul.f32 0.5, %v298
    %v300 = vsub.f32 1.5, %v299
    %v301 = vmul.f32 %v296, %v300
    %vm302 = vweird.f32 %v283
    %vm303 = vweird.f32 %v296
    %vm304 = vmor %vm302, %vm303
    %v305 = vsel %vm304, %v296, %v301
    %v306 = vrsqrt.pop %v284
    %v307 = vmul.f32 %v306, %v284
    %v308 = vmul.f32 %v307, %v306
    %v309 = vmul.f32 0.5, %v308
    %v310 = vsub.f32 1.5, %v309
    %v311 = vmul.f32 %v306, %v310
    %vm312 = vweird.f32 %v284
    %vm313 = vweird.f32 %v306
    %vm314 = vmor %vm312, %vm313
    %v315 = vsel %vm314, %v306, %v311
    %v316 = vrsqrt.pop %v285
    %v317 = vmul.f32 %v316, %v285
    %v318 = vmul.f32 %v317, %v316
    %v319 = vmul.f32 0.5, %v318
    %v320 = vsub.f32 1.5, %v319
    %v321 = vmul.f32 %v316, %v320
    %vm322 = vweird.f32 %v285
    %vm323 = vweird.f32 %v316
    %vm324 = vmor %vm322, %vm323
    %v325 = vsel %vm324, %v316, %v321
    %v330 = vrot.slane %v305, 7
    %v331 = vrot.slane %v315, 6
    %v332 = vrot.slane %v325, 5
    %vm333 = vcmask 1040384
    %v334 = vsel %vm333, %v295, %v330
    %vm335 = vcmask 1042434
    %v336 = vsel %vm335, %v331, %v332
    %v337 = vsel %vm146, %v334, %v336
    %v339 = vmul.f32 %v281, %v337
    %v340 = vld [vmem:[%s4] sm:$0xf]
    %v342 = vperm.slane %v339, 0
    %v343 = vperm.slane %v339, 1
    %v344 = vperm.slane %v339, 2
    %v345 = vperm.slane %v339, 3
    %v350 = vmul.f32 %v265, %v342
    %v351 = vmul.f32 %v266, %v343
    %v352 = vmul.f32 %v267, %v344
    %v353 = vmul.f32 %v268, %v345
    %v358 = vrot.slane %v351, 7
    %v359 = vrot.slane %v352, 6
    %v360 = vrot.slane %v353, 5
    %v361 = vsel %vm333, %v350, %v358
    %v362 = vsel %vm335, %v359, %v360
    %v363 = vsel %vm146, %v361, %v362
    %v365 = vsub.f32 %v340, %v363
    %v366 = vmul.f32 %v169, %v342
    %v367 = vmul.f32 %v182, %v343
    %v368 = vmul.f32 %v195, %v344
    %v369 = vmul.f32 %v208, %v345
    %v371 = vperm.slane %v365, 0
    %v372 = vperm.slane %v365, 1
    %v373 = vperm.slane %v365, 2
    %v374 = vperm.slane %v365, 3
    %v379 = vadd.f32 %v366, %v371
    %v380 = vadd.f32 %v367, %v372
    %v381 = vadd.f32 %v368, %v373
    %v382 = vadd.f32 %v369, %v374
    %v383 = vmax.f32 %v379, 0.0
    %v384 = vmax.f32 %v380, 0.0
    %v385 = vmax.f32 %v381, 0.0
    %v386 = vmax.f32 %v382, 0.0
    %v387 = vpack.c.bf16 %v383, %v383
    %v388 = vpack.c.bf16 %v384, %v384
    %v389 = vpack.c.bf16 %v385, %v385
    %v390 = vpack.c.bf16 %v386, %v386
    %v391 = vld [vmem:[#allocation5] sm:$0xff]
    %v392 = vld [vmem:[#allocation5 + $0x8] sm:$0xf]
    %v393 = vld [vmem:[#allocation5 + $0xc] sm:$0xff]
    %v394 = vld [vmem:[#allocation5 + $0x14] sm:$0xf]
    %v395 = vld [vmem:[#allocation5 + $0x18] sm:$0xff]
    %v396 = vld [vmem:[#allocation5 + $0x20] sm:$0xf]
    %v397 = vld [vmem:[#allocation5 + $0x24] sm:$0xff]
    %v398 = vld [vmem:[#allocation5 + $0x2c] sm:$0xf]
    %v399 = vld [vmem:[#allocation5 + $0x30] sm:$0xff]
    %v400 = vld [vmem:[#allocation5 + $0x38] sm:$0xf]
    %v401 = vld [vmem:[#allocation5 + $0x3c] sm:$0xff]
    %v402 = vld [vmem:[#allocation5 + $0x44] sm:$0xf]
    %v403 = vld [vmem:[#allocation5 + $0x48] sm:$0xff]
    %v404 = vld [vmem:[#allocation5 + $0x50] sm:$0xf]
    %v405 = vld [vmem:[#allocation5 + $0x54] sm:$0xff]
    %v406 = vld [vmem:[#allocation5 + $0x5c] sm:$0xf]
    %v407 = vld [vmem:[#allocation5 + $0x60] sm:$0xff]
    %v408 = vld [vmem:[#allocation5 + $0x68] sm:$0xf]
    %v409 = vld [vmem:[#allocation5 + $0x6c] sm:$0xff]
    %v410 = vld [vmem:[#allocation5 + $0x74] sm:$0xf]
    %v411 = vld [vmem:[#allocation5 + $0x78] sm:$0xff]
    %v412 = vld [vmem:[#allocation5 + $0x80] sm:$0xf]
    %v413 = vld [vmem:[#allocation5 + $0x84] sm:$0xff]
    %v414 = vld [vmem:[#allocation5 + $0x8c] sm:$0xf]
    %v415 = vld [vmem:[#allocation5 + $0x90] sm:$0xff]
    %v416 = vld [vmem:[#allocation5 + $0x98] sm:$0xf]
    %v417 = vld [vmem:[#allocation5 + $0x9c] sm:$0xff]
    %v418 = vld [vmem:[#allocation5 + $0xa4] sm:$0xf]
    %v419 = vld [vmem:[#allocation5 + $0xa8] sm:$0xff]
    %v420 = vld [vmem:[#allocation5 + $0xb0] sm:$0xf]
    %v421 = vld [vmem:[#allocation5 + $0xb4] sm:$0xff]
    %v422 = vld [vmem:[#allocation5 + $0xbc] sm:$0xf]
    %v423 = vld [vmem:[#allocation5 + $0xc0] sm:$0xff]
    %v424 = vld [vmem:[#allocation5 + $0xc8] sm:$0xf]
    %v425 = vld [vmem:[#allocation5 + $0xcc] sm:$0xff]
    %v426 = vld [vmem:[#allocation5 + $0xd4] sm:$0xf]
    %v427 = vld [vmem:[#allocation5 + $0xd8] sm:$0xff]
    %v428 = vld [vmem:[#allocation5 + $0xe0] sm:$0xf]
    %v429 = vld [vmem:[#allocation5 + $0xe4] sm:$0xff]
    %v430 = vld [vmem:[#allocation5 + $0xec] sm:$0xf]
    %v431 = vld [vmem:[#allocation5 + $0xf0] sm:$0xff]
    %v432 = vld [vmem:[#allocation5 + $0xf8] sm:$0xf]
    %v433 = vld [vmem:[#allocation5 + $0xfc] sm:$0xff]
    %v434 = vld [vmem:[#allocation5 + $0x104] sm:$0xf]
    %v435 = vld [vmem:[#allocation5 + $0x108] sm:$0xff]
    %v436 = vld [vmem:[#allocation5 + $0x110] sm:$0xf]
    %v437 = vld [vmem:[#allocation5 + $0x114] sm:$0xff]
    %v438 = vld [vmem:[#allocation5 + $0x11c] sm:$0xf]
    %v439 = vld [vmem:[#allocation5 + $0x120] sm:$0xff]
    %v440 = vld [vmem:[#allocation5 + $0x128] sm:$0xf]
    %v441 = vld [vmem:[#allocation5 + $0x12c] sm:$0xff]
    %v442 = vld [vmem:[#allocation5 + $0x134] sm:$0xf]
    %v443 = vld [vmem:[#allocation5 + $0x138] sm:$0xff]
    %v444 = vld [vmem:[#allocation5 + $0x140] sm:$0xf]
    %v445 = vld [vmem:[#allocation5 + $0x144] sm:$0xff]
    %v446 = vld [vmem:[#allocation5 + $0x14c] sm:$0xf]
    %v447 = vld [vmem:[#allocation5 + $0x150] sm:$0xff]
    %v448 = vld [vmem:[#allocation5 + $0x158] sm:$0xf]
    %v449 = vld [vmem:[#allocation5 + $0x15c] sm:$0xff]
    %v450 = vld [vmem:[#allocation5 + $0x164] sm:$0xf]
    %v451 = vld [vmem:[#allocation5 + $0x168] sm:$0xff]
    %v452 = vld [vmem:[#allocation5 + $0x170] sm:$0xf]
    %v453 = vld [vmem:[#allocation5 + $0x174] sm:$0xff]
    %v454 = vld [vmem:[#allocation5 + $0x17c] sm:$0xf]
    %v455 = vld [vmem:[#allocation5 + $0x180] sm:$0xff]
    %v456 = vld [vmem:[#allocation5 + $0x188] sm:$0xf]
    %v457 = vld [vmem:[#allocation5 + $0x18c] sm:$0xff]
    %v458 = vld [vmem:[#allocation5 + $0x194] sm:$0xf]
    %v459 = vld [vmem:[#allocation5 + $0x198] sm:$0xff]
    %v460 = vld [vmem:[#allocation5 + $0x1a0] sm:$0xf]
    %v461 = vld [vmem:[#allocation5 + $0x1a4] sm:$0xff]
    %v462 = vld [vmem:[#allocation5 + $0x1ac] sm:$0xf]
    %v463 = vld [vmem:[#allocation5 + $0x1b0] sm:$0xff]
    %v464 = vld [vmem:[#allocation5 + $0x1b8] sm:$0xf]
    %v465 = vld [vmem:[#allocation5 + $0x1bc] sm:$0xff]
    %v466 = vld [vmem:[#allocation5 + $0x1c4] sm:$0xf]
    %v467 = vld [vmem:[#allocation5 + $0x1c8] sm:$0xff]
    %v468 = vld [vmem:[#allocation5 + $0x1d0] sm:$0xf]
    %v469 = vld [vmem:[#allocation5 + $0x1d4] sm:$0xff]
    %v470 = vld [vmem:[#allocation5 + $0x1dc] sm:$0xf]
    %v471 = vld [vmem:[#allocation5 + $0x1e0] sm:$0xff]
    %v472 = vld [vmem:[#allocation5 + $0x1e8] sm:$0xf]
    %v473 = vld [vmem:[#allocation5 + $0x1ec] sm:$0xff]
    %v474 = vld [vmem:[#allocation5 + $0x1f4] sm:$0xf]
    %v475 = vld [vmem:[#allocation5 + $0x1f8] sm:$0xff]
    %v476 = vld [vmem:[#allocation5 + $0x200] sm:$0xf]
    %v477 = vld [vmem:[#allocation5 + $0x204] sm:$0xff]
    %v478 = vld [vmem:[#allocation5 + $0x20c] sm:$0xf]
    %v479 = vld [vmem:[#allocation5 + $0x210] sm:$0xff]
    %v480 = vld [vmem:[#allocation5 + $0x218] sm:$0xf]
    %v481 = vld [vmem:[#allocation5 + $0x21c] sm:$0xff]
    %v482 = vld [vmem:[#allocation5 + $0x224] sm:$0xf]
    %v483 = vld [vmem:[#allocation5 + $0x228] sm:$0xff]
    %v484 = vld [vmem:[#allocation5 + $0x230] sm:$0xf]
    %v485 = vld [vmem:[#allocation5 + $0x234] sm:$0xff]
    %v486 = vld [vmem:[#allocation5 + $0x23c] sm:$0xf]
    %v487 = vld [vmem:[#allocation5 + $0x240] sm:$0xff]
    %v488 = vld [vmem:[#allocation5 + $0x248] sm:$0xf]
    %v489 = vld [vmem:[#allocation5 + $0x24c] sm:$0xff]
    %v490 = vld [vmem:[#allocation5 + $0x254] sm:$0xf]
    %v591 = vunpack.c.l.b16 %v391
    %v592 = vunpack.c.h.b16 %v391
    %v593 = vunpack.c.l.b16 %v392
    %v594 = vunpack.c.l.b16 %v393
    %v595 = vunpack.c.h.b16 %v393
    %v596 = vunpack.c.l.b16 %v394
    %v597 = vunpack.c.l.b16 %v395
    %v598 = vunpack.c.h.b16 %v395
    %v599 = vunpack.c.l.b16 %v396
    %v600 = vunpack.c.l.b16 %v397
    %v601 = vunpack.c.h.b16 %v397
    %v602 = vunpack.c.l.b16 %v398
    %v603 = vunpack.c.l.b16 %v399
    %v604 = vunpack.c.h.b16 %v399
    %v605 = vunpack.c.l.b16 %v400
    %v606 = vunpack.c.l.b16 %v401
    %v607 = vunpack.c.h.b16 %v401
    %v608 = vunpack.c.l.b16 %v402
    %v609 = vunpack.c.l.b16 %v403
    %v610 = vunpack.c.h.b16 %v403
    %v611 = vunpack.c.l.b16 %v404
    %v612 = vunpack.c.l.b16 %v405
    %v613 = vunpack.c.h.b16 %v405
    %v614 = vunpack.c.l.b16 %v406
    %v615 = vunpack.c.l.b16 %v407
    %v616 = vunpack.c.h.b16 %v407
    %v617 = vunpack.c.l.b16 %v408
    %v618 = vunpack.c.l.b16 %v409
    %v619 = vunpack.c.h.b16 %v409
    %v620 = vunpack.c.l.b16 %v410
    %v621 = vunpack.c.l.b16 %v411
    %v622 = vunpack.c.h.b16 %v411
    %v623 = vunpack.c.l.b16 %v412
    %v624 = vunpack.c.l.b16 %v413
    %v625 = vunpack.c.h.b16 %v413
    %v626 = vunpack.c.l.b16 %v414
    %v627 = vunpack.c.l.b16 %v415
    %v628 = vunpack.c.h.b16 %v415
    %v629 = vunpack.c.l.b16 %v416
    %v630 = vunpack.c.l.b16 %v417
    %v631 = vunpack.c.h.b16 %v417
    %v632 = vunpack.c.l.b16 %v418
    %v633 = vunpack.c.l.b16 %v419
    %v634 = vunpack.c.h.b16 %v419
    %v635 = vunpack.c.l.b16 %v420
    %v636 = vunpack.c.l.b16 %v421
    %v637 = vunpack.c.h.b16 %v421
    %v638 = vunpack.c.l.b16 %v422
    %v639 = vunpack.c.l.b16 %v423
    %v640 = vunpack.c.h.b16 %v423
    %v641 = vunpack.c.l.b16 %v424
    %v642 = vunpack.c.l.b16 %v425
    %v643 = vunpack.c.h.b16 %v425
    %v644 = vunpack.c.l.b16 %v426
    %v645 = vunpack.c.l.b16 %v427
    %v646 = vunpack.c.h.b16 %v427
    %v647 = vunpack.c.l.b16 %v428
    %v648 = vunpack.c.l.b16 %v429
    %v649 = vunpack.c.h.b16 %v429
    %v650 = vunpack.c.l.b16 %v430
    %v651 = vunpack.c.l.b16 %v431
    %v652 = vunpack.c.h.b16 %v431
    %v653 = vunpack.c.l.b16 %v432
    %v654 = vunpack.c.l.b16 %v433
    %v655 = vunpack.c.h.b16 %v433
    %v656 = vunpack.c.l.b16 %v434
    %v657 = vunpack.c.l.b16 %v435
    %v658 = vunpack.c.h.b16 %v435
    %v659 = vunpack.c.l.b16 %v436
    %v660 = vunpack.c.l.b16 %v437
    %v661 = vunpack.c.h.b16 %v437
    %v662 = vunpack.c.l.b16 %v438
    %v663 = vunpack.c.l.b16 %v439
    %v664 = vunpack.c.h.b16 %v439
    %v665 = vunpack.c.l.b16 %v440
    %v666 = vunpack.c.l.b16 %v441
    %v667 = vunpack.c.h.b16 %v441
    %v668 = vunpack.c.l.b16 %v442
    %v669 = vunpack.c.l.b16 %v443
    %v670 = vunpack.c.h.b16 %v443
    %v671 = vunpack.c.l.b16 %v444
    %v672 = vunpack.c.l.b16 %v445
    %v673 = vunpack.c.h.b16 %v445
    %v674 = vunpack.c.l.b16 %v446
    %v675 = vunpack.c.l.b16 %v447
    %v676 = vunpack.c.h.b16 %v447
    %v677 = vunpack.c.l.b16 %v448
    %v678 = vunpack.c.l.b16 %v449
    %v679 = vunpack.c.h.b16 %v449
    %v680 = vunpack.c.l.b16 %v450
    %v681 = vunpack.c.l.b16 %v451
    %v682 = vunpack.c.h.b16 %v451
    %v683 = vunpack.c.l.b16 %v452
    %v684 = vunpack.c.l.b16 %v453
    %v685 = vunpack.c.h.b16 %v453
    %v686 = vunpack.c.l.b16 %v454
    %v687 = vunpack.c.l.b16 %v455
    %v688 = vunpack.c.h.b16 %v455
    %v689 = vunpack.c.l.b16 %v456
    %v690 = vunpack.c.l.b16 %v457
    %v691 = vunpack.c.h.b16 %v457
    %v692 = vunpack.c.l.b16 %v458
    %v693 = vunpack.c.l.b16 %v459
    %v694 = vunpack.c.h.b16 %v459
    %v695 = vunpack.c.l.b16 %v460
    %v696 = vunpack.c.l.b16 %v461
    %v697 = vunpack.c.h.b16 %v461
    %v698 = vunpack.c.l.b16 %v462
    %v699 = vunpack.c.l.b16 %v463
    %v700 = vunpack.c.h.b16 %v463
    %v701 = vunpack.c.l.b16 %v464
    %v702 = vunpack.c.l.b16 %v465
    %v703 = vunpack.c.h.b16 %v465
    %v704 = vunpack.c.l.b16 %v466
    %v705 = vunpack.c.l.b16 %v467
    %v706 = vunpack.c.h.b16 %v467
    %v707 = vunpack.c.l.b16 %v468
    %v708 = vunpack.c.l.b16 %v469
    %v709 = vunpack.c.h.b16 %v469
    %v710 = vunpack.c.l.b16 %v470
    %v711 = vunpack.c.l.b16 %v471
    %v712 = vunpack.c.h.b16 %v471
    %v713 = vunpack.c.l.b16 %v472
    %v714 = vunpack.c.l.b16 %v473
    %v715 = vunpack.c.h.b16 %v473
    %v716 = vunpack.c.l.b16 %v474
    %v717 = vunpack.c.l.b16 %v475
    %v718 = vunpack.c.h.b16 %v475
    %v719 = vunpack.c.l.b16 %v476
    %v720 = vunpack.c.l.b16 %v477
    %v721 = vunpack.c.h.b16 %v477
    %v722 = vunpack.c.l.b16 %v478
    %v723 = vunpack.c.l.b16 %v479
    %v724 = vunpack.c.h.b16 %v479
    %v725 = vunpack.c.l.b16 %v480
    %v726 = vunpack.c.l.b16 %v481
    %v727 = vunpack.c.h.b16 %v481
    %v728 = vunpack.c.l.b16 %v482
    %v729 = vunpack.c.l.b16 %v483
    %v730 = vunpack.c.h.b16 %v483
    %v731 = vunpack.c.l.b16 %v484
    %v732 = vunpack.c.l.b16 %v485
    %v733 = vunpack.c.h.b16 %v485
    %v734 = vunpack.c.l.b16 %v486
    %v735 = vunpack.c.l.b16 %v487
    %v736 = vunpack.c.h.b16 %v487
    %v737 = vunpack.c.l.b16 %v488
    %v738 = vunpack.c.l.b16 %v489
    %v739 = vunpack.c.h.b16 %v489
    %v740 = vunpack.c.l.b16 %v490
    %v741 = vpack.c.b16 %v594, %v591
    %v742 = vpack.c.b16 %v595, %v592
    %v743 = vpack.c.b16 %v596, %v593
    %v744 = vpack.c.b16 %v600, %v597
    %v745 = vpack.c.b16 %v601, %v598
    %v746 = vpack.c.b16 %v602, %v599
    %v747 = vpack.c.b16 %v606, %v603
    %v748 = vpack.c.b16 %v607, %v604
    %v749 = vpack.c.b16 %v608, %v605
    %v750 = vpack.c.b16 %v612, %v609
    %v751 = vpack.c.b16 %v613, %v610
    %v752 = vpack.c.b16 %v614, %v611
    %v753 = vpack.c.b16 %v618, %v615
    %v754 = vpack.c.b16 %v619, %v616
    %v755 = vpack.c.b16 %v620, %v617
    %v756 = vpack.c.b16 %v624, %v621
    %v757 = vpack.c.b16 %v625, %v622
    %v758 = vpack.c.b16 %v626, %v623
    %v759 = vpack.c.b16 %v630, %v627
    %v760 = vpack.c.b16 %v631, %v628
    %v761 = vpack.c.b16 %v632, %v629
    %v762 = vpack.c.b16 %v636, %v633
    %v763 = vpack.c.b16 %v637, %v634
    %v764 = vpack.c.b16 %v638, %v635
    %v765 = vpack.c.b16 %v642, %v639
    %v766 = vpack.c.b16 %v643, %v640
    %v767 = vpack.c.b16 %v644, %v641
    %v768 = vpack.c.b16 %v648, %v645
    %v769 = vpack.c.b16 %v649, %v646
    %v770 = vpack.c.b16 %v650, %v647
    %v771 = vpack.c.b16 %v654, %v651
    %v772 = vpack.c.b16 %v655, %v652
    %v773 = vpack.c.b16 %v656, %v653
    %v774 = vpack.c.b16 %v660, %v657
    %v775 = vpack.c.b16 %v661, %v658
    %v776 = vpack.c.b16 %v662, %v659
    %v777 = vpack.c.b16 %v666, %v663
    %v778 = vpack.c.b16 %v667, %v664
    %v779 = vpack.c.b16 %v668, %v665
    %v780 = vpack.c.b16 %v672, %v669
    %v781 = vpack.c.b16 %v673, %v670
    %v782 = vpack.c.b16 %v674, %v671
    %v783 = vpack.c.b16 %v678, %v675
    %v784 = vpack.c.b16 %v679, %v676
    %v785 = vpack.c.b16 %v680, %v677
    %v786 = vpack.c.b16 %v684, %v681
    %v787 = vpack.c.b16 %v685, %v682
    %v788 = vpack.c.b16 %v686, %v683
    %v789 = vpack.c.b16 %v690, %v687
    %v790 = vpack.c.b16 %v691, %v688
    %v791 = vpack.c.b16 %v692, %v689
    %v792 = vpack.c.b16 %v696, %v693
    %v793 = vpack.c.b16 %v697, %v694
    %v794 = vpack.c.b16 %v698, %v695
    %v795 = vpack.c.b16 %v702, %v699
    %v796 = vpack.c.b16 %v703, %v700
    %v797 = vpack.c.b16 %v704, %v701
    %v798 = vpack.c.b16 %v708, %v705
    %v799 = vpack.c.b16 %v709, %v706
    %v800 = vpack.c.b16 %v710, %v707
    %v801 = vpack.c.b16 %v714, %v711
    %v802 = vpack.c.b16 %v715, %v712
    %v803 = vpack.c.b16 %v716, %v713
    %v804 = vpack.c.b16 %v720, %v717
    %v805 = vpack.c.b16 %v721, %v718
    %v806 = vpack.c.b16 %v722, %v719
    %v807 = vpack.c.b16 %v726, %v723
    %v808 = vpack.c.b16 %v727, %v724
    %v809 = vpack.c.b16 %v728, %v725
    %v810 = vpack.c.b16 %v732, %v729
    %v811 = vpack.c.b16 %v733, %v730
    %v812 = vpack.c.b16 %v734, %v731
    %v813 = vpack.c.b16 %v738, %v735
    %v814 = vpack.c.b16 %v739, %v736
    %v815 = vpack.c.b16 %v740, %v737
    %v892 = vsel %vm103, %v390, 0
    %894 = vmatpush.bf16.msra.mxu0 %v762
    %895 = vmatpush.bf16.msra.mxu0 %v759
    %896 = vmatpush.bf16.msra.mxu0 %v756
    %897 = vmatpush.bf16.msra.mxu0 %v753
    %898 = vmatpush.bf16.msra.mxu0 %v750
    %899 = vmatpush.bf16.msra.mxu0 %v747
    %900 = vmatpush.bf16.msra.mxu0 %v744
    %901 = vmatpush.bf16.msra.mxu0 %v741
    %902 = vmatmul.bf16.gmra.mxu0 %v387
    %v903 = vpop.f32.mrf.mxu0
    %v904 = vadd.f32 0.0, %v903
    %v905 = vpop.f32.mrf.mxu0
    %906 = vdwg.mxu0
    %907 = vmatpush.bf16.msra.mxu0 %v786
    %908 = vmatpush.bf16.msra.mxu0 %v783
    %909 = vmatpush.bf16.msra.mxu0 %v780
    %910 = vmatpush.bf16.msra.mxu0 %v777
    %911 = vmatpush.bf16.msra.mxu0 %v774
    %912 = vmatpush.bf16.msra.mxu0 %v771
    %913 = vmatpush.bf16.msra.mxu0 %v768
    %914 = vmatpush.bf16.msra.mxu0 %v765
    %915 = vmatmul.bf16.gmra.mxu0 %v388
    %v916 = vpop.f32.mrf.mxu0
    %v917 = vadd.f32 %v904, %v916
    %v918 = vpop.f32.mrf.mxu0
    %919 = vdwg.mxu0
    %920 = vmatpush.bf16.msra.mxu0 %v810
    %921 = vmatpush.bf16.msra.mxu0 %v807
    %922 = vmatpush.bf16.msra.mxu0 %v804
    %923 = vmatpush.bf16.msra.mxu0 %v801
    %924 = vmatpush.bf16.msra.mxu0 %v798
    %925 = vmatpush.bf16.msra.mxu0 %v795
    %926 = vmatpush.bf16.msra.mxu0 %v792
    %927 = vmatpush.bf16.msra.mxu0 %v789
    %928 = vmatmul.bf16.gmra.mxu0 %v389
    %v929 = vpop.f32.mrf.mxu0
    %v930 = vadd.f32 %v917, %v929
    %v931 = vpop.f32.mrf.mxu0
    %932 = vdwg.mxu0
    %933 = vmatpush.bf16.msra.mxu0 0
    %934 = vmatpush.bf16.msra.mxu0 0
    %935 = vmatpush.bf16.msra.mxu0 0
    %936 = vmatpush.bf16.msra.mxu0 0
    %937 = vmatpush.bf16.msra.mxu0 0
    %938 = vmatpush.bf16.msra.mxu0 0
    %939 = vmatpush.bf16.msra.mxu0 0
    %940 = vmatpush.bf16.msra.mxu0 %v813
    %941 = vmatmul.bf16.gmra.mxu0 %v892
    %v942 = vpop.f32.mrf.mxu0
    %v943 = vadd.f32 %v930, %v942
    %v944 = vpop.f32.mrf.mxu0
    %945 = vdwg.mxu0
    %946 = vmatpush.bf16.msra.mxu0 %v763
    %947 = vmatpush.bf16.msra.mxu0 %v760
    %948 = vmatpush.bf16.msra.mxu0 %v757
    %949 = vmatpush.bf16.msra.mxu0 %v754
    %950 = vmatpush.bf16.msra.mxu0 %v751
    %951 = vmatpush.bf16.msra.mxu0 %v748
    %952 = vmatpush.bf16.msra.mxu0 %v745
    %953 = vmatpush.bf16.msra.mxu0 %v742
    %954 = vmatmul.bf16.gmra.mxu0 %v387
    %v955 = vpop.f32.mrf.mxu0
    %v956 = vadd.f32 0.0, %v955
    %v957 = vpop.f32.mrf.mxu0
    %958 = vdwg.mxu0
    %959 = vmatpush.bf16.msra.mxu0 %v787
    %960 = vmatpush.bf16.msra.mxu0 %v784
    %961 = vmatpush.bf16.msra.mxu0 %v781
    %962 = vmatpush.bf16.msra.mxu0 %v778
    %963 = vmatpush.bf16.msra.mxu0 %v775
    %964 = vmatpush.bf16.msra.mxu0 %v772
    %965 = vmatpush.bf16.msra.mxu0 %v769
    %966 = vmatpush.bf16.msra.mxu0 %v766
    %967 = vmatmul.bf16.gmra.mxu0 %v388
    %v968 = vpop.f32.mrf.mxu0
    %v969 = vadd.f32 %v956, %v968
    %v970 = vpop.f32.mrf.mxu0
    %971 = vdwg.mxu0
    %972 = vmatpush.bf16.msra.mxu0 %v811
    %973 = vmatpush.bf16.msra.mxu0 %v808
    %974 = vmatpush.bf16.msra.mxu0 %v805
    %975 = vmatpush.bf16.msra.mxu0 %v802
    %976 = vmatpush.bf16.msra.mxu0 %v799
    %977 = vmatpush.bf16.msra.mxu0 %v796
    %978 = vmatpush.bf16.msra.mxu0 %v793
    %979 = vmatpush.bf16.msra.mxu0 %v790
    %980 = vmatmul.bf16.gmra.mxu0 %v389
    %v981 = vpop.f32.mrf.mxu0
    %v982 = vadd.f32 %v969, %v981
    %v983 = vpop.f32.mrf.mxu0
    %984 = vdwg.mxu0
    %985 = vmatpush.bf16.msra.mxu0 0
    %986 = vmatpush.bf16.msra.mxu0 0
    %987 = vmatpush.bf16.msra.mxu0 0
    %988 = vmatpush.bf16.msra.mxu0 0
    %989 = vmatpush.bf16.msra.mxu0 0
    %990 = vmatpush.bf16.msra.mxu0 0
    %991 = vmatpush.bf16.msra.mxu0 0
    %992 = vmatpush.bf16.msra.mxu0 %v814
    %993 = vmatmul.bf16.gmra.mxu0 %v892
    %v994 = vpop.f32.mrf.mxu0
    %v995 = vadd.f32 %v982, %v994
    %v996 = vpop.f32.mrf.mxu0
    %997 = vdwg.mxu0
    %998 = vmatpush.bf16.msra.mxu0 %v764
    %999 = vmatpush.bf16.msra.mxu0 %v761
    %1000 = vmatpush.bf16.msra.mxu0 %v758
    %1001 = vmatpush.bf16.msra.mxu0 %v755
    %1002 = vmatpush.bf16.msra.mxu0 %v752
    %1003 = vmatpush.bf16.msra.mxu0 %v749
    %1004 = vmatpush.bf16.msra.mxu0 %v746
    %1005 = vmatpush.bf16.msra.mxu0 %v743
    %1006 = vmatmul.bf16.gmra.mxu0 %v387
    %v1007 = vpop.f32.mrf.mxu0
    %v1008 = vadd.f32 0.0, %v1007
    %v1009 = vpop.f32.mrf.mxu0
    %1010 = vdwg.mxu0
    %1011 = vmatpush.bf16.msra.mxu0 %v788
    %1012 = vmatpush.bf16.msra.mxu0 %v785
    %1013 = vmatpush.bf16.msra.mxu0 %v782
    %1014 = vmatpush.bf16.msra.mxu0 %v779
    %1015 = vmatpush.bf16.msra.mxu0 %v776
    %1016 = vmatpush.bf16.msra.mxu0 %v773
    %1017 = vmatpush.bf16.msra.mxu0 %v770
    %1018 = vmatpush.bf16.msra.mxu0 %v767
    %1019 = vmatmul.bf16.gmra.mxu0 %v388
    %v1020 = vpop.f32.mrf.mxu0
    %v1021 = vadd.f32 %v1008, %v1020
    %v1022 = vpop.f32.mrf.mxu0
    %1023 = vdwg.mxu0
    %1024 = vmatpush.bf16.msra.mxu0 %v812
    %1025 = vmatpush.bf16.msra.mxu0 %v809
    %1026 = vmatpush.bf16.msra.mxu0 %v806
    %1027 = vmatpush.bf16.msra.mxu0 %v803
    %1028 = vmatpush.bf16.msra.mxu0 %v800
    %1029 = vmatpush.bf16.msra.mxu0 %v797
    %1030 = vmatpush.bf16.msra.mxu0 %v794
    %1031 = vmatpush.bf16.msra.mxu0 %v791
    %1032 = vmatmul.bf16.gmra.mxu0 %v389
    %v1033 = vpop.f32.mrf.mxu0
    %v1034 = vadd.f32 %v1021, %v1033
    %v1035 = vpop.f32.mrf.mxu0
    %1036 = vdwg.mxu0
    %1037 = vmatpush.bf16.msra.mxu0 0
    %1038 = vmatpush.bf16.msra.mxu0 0
    %1039 = vmatpush.bf16.msra.mxu0 0
    %1040 = vmatpush.bf16.msra.mxu0 0
    %1041 = vmatpush.bf16.msra.mxu0 0
    %1042 = vmatpush.bf16.msra.mxu0 0
    %1043 = vmatpush.bf16.msra.mxu0 0
    %1044 = vmatpush.bf16.msra.mxu0 %v815
    %1045 = vmatmul.bf16.gmra.mxu0 %v892
    %v1046 = vpop.f32.mrf.mxu0
    %v1047 = vadd.f32 %v1034, %v1046
    %v1048 = vpop.f32.mrf.mxu0
    %1049 = vdwg.mxu0
    %v1050 = vrot.slane %v943, 4
    %v1051 = vadd.f32 %v943, %v1050
    %v1052 = vrot.slane %v1051, 2
    %v1053 = vadd.f32 %v1051, %v1052
    %v1054 = vrot.slane %v1053, 1
    %v1055 = vadd.f32 %v1053, %v1054
    %v1056 = vrot.slane %v995, 4
    %v1057 = vadd.f32 %v995, %v1056
    %v1058 = vrot.slane %v1057, 2
    %v1059 = vadd.f32 %v1057, %v1058
    %v1060 = vrot.slane %v1059, 1
    %v1061 = vadd.f32 %v1059, %v1060
    %vm1062 = vcmask 359424
    %v1063 = vsel %vm1062, %v1047, 0.0
    %v1064 = vrot.slane %v1063, 4
    %v1065 = vadd.f32 %v1063, %v1064
    %v1066 = vrot.slane %v1065, 2
    %v1067 = vadd.f32 %v1065, %v1066
    %v1068 = vrot.slane %v1067, 1
    %v1069 = vadd.f32 %v1067, %v1068
    %v1070 = vmul.f32 %v943, %v943
    %v1071 = vmul.f32 %v995, %v995
    %v1072 = vmul.f32 %v1047, %v1047
    %v1073 = vrot.slane %v1070, 4
    %v1074 = vadd.f32 %v1070, %v1073
    %v1075 = vrot.slane %v1074, 2
    %v1076 = vadd.f32 %v1074, %v1075
    %v1077 = vrot.slane %v1076, 1
    %v1078 = vadd.f32 %v1076, %v1077
    %v1079 = vrot.slane %v1071, 4
    %v1080 = vadd.f32 %v1071, %v1079
    %v1081 = vrot.slane %v1080, 2
    %v1082 = vadd.f32 %v1080, %v1081
    %v1083 = vrot.slane %v1082, 1
    %v1084 = vadd.f32 %v1082, %v1083
    %v1085 = vsel %vm1062, %v1072, 0.0
    %v1086 = vrot.slane %v1085, 4
    %v1087 = vadd.f32 %v1085, %v1086
    %v1088 = vrot.slane %v1087, 2
    %v1089 = vadd.f32 %v1087, %v1088
    %v1090 = vrot.slane %v1089, 1
    %v1091 = vadd.f32 %v1089, %v1090
    %v1092 = vmul.f32 %v1055, 0.125
    %v1093 = vmul.f32 %v1061, 0.125
    %v1094 = vmul.f32 %v1069, 0.125
    %v1095 = vmul.f32 %v1078, 0.125
    %v1096 = vmul.f32 %v1084, 0.125
    %v1097 = vmul.f32 %v1091, 0.125
    %v1098 = vmul.f32 %v1092, %v1092
    %v1099 = vmul.f32 %v1093, %v1093
    %v1100 = vmul.f32 %v1094, %v1094
    %v1101 = vsub.f32 %v1095, %v1098
    %v1102 = vsub.f32 %v1096, %v1099
    %v1103 = vsub.f32 %v1097, %v1100
    %v1104 = vld [vmem:[%s6] sm:$0x7]
    %v1105 = vadd.f32 %v1101, 1e-05
    %v1106 = vadd.f32 %v1102, 1e-05
    %v1107 = vadd.f32 %v1103, 1e-05
    %v1108 = vrsqrt.pop %v1105
    %v1109 = vmul.f32 %v1108, %v1105
    %v1110 = vmul.f32 %v1109, %v1108
    %v1111 = vmul.f32 0.5, %v1110
    %v1112 = vsub.f32 1.5, %v1111
    %v1113 = vmul.f32 %v1108, %v1112
    %vm1114 = vweird.f32 %v1105
    %vm1115 = vweird.f32 %v1108
    %vm1116 = vmor %vm1114, %vm1115
    %v1117 = vsel %vm1116, %v1108, %v1113
    %v1118 = vrsqrt.pop %v1106
    %v1119 = vmul.f32 %v1118, %v1106
    %v1120 = vmul.f32 %v1119, %v1118
    %v1121 = vmul.f32 0.5, %v1120
    %v1122 = vsub.f32 1.5, %v1121
    %v1123 = vmul.f32 %v1118, %v1122
    %vm1124 = vweird.f32 %v1106
    %vm1125 = vweird.f32 %v1118
    %vm1126 = vmor %vm1124, %vm1125
    %v1127 = vsel %vm1126, %v1118, %v1123
    %v1128 = vrsqrt.pop %v1107
    %v1129 = vmul.f32 %v1128, %v1107
    %v1130 = vmul.f32 %v1129, %v1128
    %v1131 = vmul.f32 0.5, %v1130
    %v1132 = vsub.f32 1.5, %v1131
    %v1133 = vmul.f32 %v1128, %v1132
    %vm1134 = vweird.f32 %v1107
    %vm1135 = vweird.f32 %v1128
    %vm1136 = vmor %vm1134, %vm1135
    %v1137 = vsel %vm1136, %v1128, %v1133
    %v1141 = vrot.slane %v1127, 7
    %v1142 = vrot.slane %v1137, 6
    %v1143 = vsel %vm333, %v1117, %v1141
    %v1144 = vsel %vm146, %v1143, %v1142
    %v1146 = vmul.f32 %v1104, %v1144
    %v1147 = vld [vmem:[#allocation7] sm:$0x7]
    %v1149 = vperm.slane %v1146, 0
    %v1150 = vperm.slane %v1146, 1
    %v1151 = vperm.slane %v1146, 2
    %v1155 = vmul.f32 %v1092, %v1149
    %v1156 = vmul.f32 %v1093, %v1150
    %v1157 = vmul.f32 %v1094, %v1151
    %v1161 = vrot.slane %v1156, 7
    %v1162 = vrot.slane %v1157, 6
    %v1163 = vsel %vm333, %v1155, %v1161
    %v1164 = vsel %vm146, %v1163, %v1162
    %v1166 = vsub.f32 %v1147, %v1164
    %v1167 = vmul.f32 %v943, %v1149
    %v1168 = vmul.f32 %v995, %v1150
    %v1169 = vmul.f32 %v1047, %v1151
    %v1171 = vperm.slane %v1166, 0
    %v1172 = vperm.slane %v1166, 1
    %v1173 = vperm.slane %v1166, 2
    %v1177 = vadd.f32 %v1167, %v1171
    %v1178 = vadd.f32 %v1168, %v1172
    %v1179 = vadd.f32 %v1169, %v1173
    %v1180 = vmax.f32 %v1177, 0.0
    %v1181 = vmax.f32 %v1178, 0.0
    %v1182 = vmax.f32 %v1179, 0.0
    %v1183 = vld [vmem:[#allocation8] sm:$0x7]
    %v1185 = vperm.slane %v1183, 0
    %v1186 = vperm.slane %v1183, 1
    %v1187 = vperm.slane %v1183, 2
    %v1191 = vmul.f32 %v1180, %v1185
    %v1192 = vmul.f32 %v1181, %v1186
    %v1193 = vmul.f32 %v1182, %v1187
    %v1194 = vadd.f32 %v1191, %v1192
    %v1195 = vsel %vm1062, %v1193, 0.0
    %v1196 = vadd.f32 %v1194, %v1195
    %1197 = vadd.xlane.f32.xlu0 %v1196
    %v1198 = vpop.xlane.xlu0 %1197
    %v1199 = vld [vmem:[#allocation2] sm:$0x1]
    %v1201 = vperm.slane %v1199, 0
    %v1203 = vadd.f32 %v1198, %v1201
    %vm1204 = vcmask 7168
    %1205 = vst.msk [vmem:[%s10] sm:$0xff] %vm1204, %v1203
    // Predicated region
    $region58: #{tpu_custom_call.1} parent=1 // pred_check
      _
    $region59: #{tpu_custom_call.1} parent=1 // pred_check_branch
      %1207 = sbr.rel (0) target = $region61
    $region60: #{tpu_custom_call.1} parent=1 // pred_region
      _
    $region61: #{tpu_custom_call.1} parent=1 // pred_fallthru
      _
    // Predicated region
    $region62: #{tpu_custom_call.1} parent=1 // pred_check
      _
    $region63: #{tpu_custom_call.1} parent=1 // pred_check_branch
      %1209 = sbr.rel (0) target = $region65
    $region64: #{tpu_custom_call.1} parent=1 // pred_region
      _
    $region65: #{tpu_custom_call.1} parent=1 // pred_fallthru
      _
    %1210 = vsyncpa [#allocation4], 1
    %1211 = vsyncpa [#allocation6], 1
    %1212 = vsyncpa [#allocation9], 1

</llo_original>
